<compile_context>
chip_gen: v6e
topology: v6e:2x2x1
jax: 0.10.0
libtpu: 0.0.40
codegen_flags: <defaults>
</compile_context>

<pallas_src>
import functools

import jax
import jax.numpy as jnp
from jax.experimental import pallas as pl
from jax.experimental.pallas import tpu as pltpu

_EPS = 1e-5          # nn.LayerNorm default eps
_LANE = 128

# Row layout of the packed vector-parameter array (each row zero-padded to P):
_R_LN0_W, _R_LN0_B = 0, 1                 # feature_norm weight / bias (d_in)
_R_B1, _R_LN1_W, _R_LN1_B = 2, 3, 4       # fc1 bias + LayerNorm (H)
_R_B2, _R_LN2_W, _R_LN2_B = 5, 6, 7       # fc2 bias + LayerNorm (H)
_R_BG = 8                                 # fused GRU gate bias (4*HP)
_R_LN3_W, _R_LN3_B = 9, 10                # after_rnn_norm (H)
_R_B3 = 11                                # fc3 bias (padded to A_pad)
_N_VEC_ROWS = 16                          # padded to a sublane multiple


def _round_up(x, m):
    return ((x + m - 1) // m) * m


def _choose_tile(b_pad):
    """Batch tile: big blocks to amortize ~0.35us/step, >=2 blocks for v7x."""
    if b_pad <= 256:
        return b_pad
    return min(512, _round_up((b_pad + 1) // 2, 8))


def _happo_kernel(x_ref, h_ref, m_ref, w1_ref, w2_ref, wg_ref, w3_ref,
                  vec_ref, q_ref, hout_ref, *, d_in, hidden):
    HP = h_ref.shape[-1]          # lane-padded hidden width (multiple of 128)
    DP = x_ref.shape[-1]          # padded input width
    AP = q_ref.shape[-1]          # padded action width

    def vrow(r, n):
        # One packed parameter row, first n lanes -> (1, n), f32.
        return vec_ref[r:r + 1, :n]

    def layer_norm(v, w, b, n):
        # Single-pass LayerNorm in f32 (padding lanes are zero, so sums are
        # unaffected; divide by the REAL feature count n).
        s = jnp.sum(v, axis=-1, keepdims=True)
        ss = jnp.sum(v * v, axis=-1, keepdims=True)
        mu = s * (1.0 / n)
        var = ss * (1.0 / n) - mu * mu
        return (v - mu) * jax.lax.rsqrt(var + _EPS) * w + b

    def lin(v, w_ref, brow):
        # bf16 MXU matmul, f32 accumulation, f32 bias add.
        return jnp.dot(v.astype(w_ref.dtype), w_ref[...],
                       preferred_element_type=jnp.float32) + brow

    # feature_norm
    x = layer_norm(x_ref[...], vrow(_R_LN0_W, DP), vrow(_R_LN0_B, DP), d_in)
    # fc1: Linear + ReLU + LayerNorm
    x = layer_norm(jnp.maximum(lin(x, w1_ref, vrow(_R_B1, HP)), 0.0),
                   vrow(_R_LN1_W, HP), vrow(_R_LN1_B, HP), hidden)
    # fc2: Linear + ReLU + LayerNorm
    x = layer_norm(jnp.maximum(lin(x, w2_ref, vrow(_R_B2, HP)), 0.0),
                   vrow(_R_LN2_W, HP), vrow(_R_LN2_B, HP), hidden)

    # GRU cell (PyTorch gate order r, z, n), single fused gate matmul:
    #   [x | h_prev] @ [ [Wir|Wiz|Win| 0 ] ; [Whr|Whz| 0 |Whn] ]
    # Gate blocks are each HP (128-multiple) wide -> aligned vreg slices.
    h_prev = h_ref[...] * m_ref[...]                        # (TB, HP) * (TB, 1)
    xh = jnp.concatenate([x, h_prev], axis=-1)              # (TB, 2*HP)
    g = lin(xh, wg_ref, vrow(_R_BG, 4 * HP))                # (TB, 4*HP)
    r = jax.nn.sigmoid(g[:, 0:HP])
    z = jax.nn.sigmoid(g[:, HP:2 * HP])
    n = jnp.tanh(g[:, 2 * HP:3 * HP] + r * g[:, 3 * HP:4 * HP])
    h_new = (1.0 - z) * n + z * h_prev                      # padding lanes stay 0
    hout_ref[...] = h_new                                   # lane-dense store

    # after_rnn_norm + fc3 (output is a lane-dense, zero-padded slab)
    xo = layer_norm(h_new, vrow(_R_LN3_W, HP), vrow(_R_LN3_B, HP), hidden)
    q_ref[...] = lin(xo, w3_ref, vrow(_R_B3, AP))


def _pack_params(params, d_in, d_pad, hidden, h_pad, a_pad,
                 matmul_dtype=jnp.bfloat16):
    """Pad/fuse weights for the kernel layout; pack all small vectors."""
    p = params
    H, HP = hidden, h_pad

    def pad2(v, rows, cols):
        return jnp.pad(v, ((0, rows - v.shape[0]), (0, cols - v.shape[1])))

    w1 = pad2(p["w1"], d_pad, HP).astype(matmul_dtype)           # (DP, HP)
    w2 = pad2(p["w2"], HP, HP).astype(matmul_dtype)              # (HP, HP)
    w3 = pad2(p["w3"], HP, a_pad).astype(matmul_dtype)           # (HP, A_pad)

    # Fused, gate-aligned GRU weight: rows [x-part | h-part], columns are four
    # HP-wide blocks [r_sum | z_sum | n_x | n_h].
    def gate_block(wx, wh):
        blk = jnp.zeros((2 * HP, HP), jnp.float32)
        if wx is not None:
            blk = blk.at[:H, :H].set(wx)
        if wh is not None:
            blk = blk.at[HP:HP + H, :H].set(wh)
        return blk

    w_g = jnp.concatenate([
        gate_block(p["w_ir"], p["w_hr"]),
        gate_block(p["w_iz"], p["w_hz"]),
        gate_block(p["w_in"], None),
        gate_block(None, p["w_hn"]),
    ], axis=1).astype(matmul_dtype)                              # (2*HP, 4*HP)

    def bias_block(*bs):
        out = jnp.zeros((1, HP), jnp.float32)
        for b in bs:
            out = out.at[:, :H].add(b)
        return out

    b_g = jnp.concatenate([
        bias_block(p["b_ir"], p["b_hr"]),
        bias_block(p["b_iz"], p["b_hz"]),
        bias_block(p["b_in"]),
        bias_block(p["b_hn"]),
    ], axis=1)                                                   # (1, 4*HP)

    A = p["w3"].shape[1]
    b3 = jnp.pad(p["b3"], ((0, 0), (0, a_pad - A)))              # (1, A_pad)

    P = _round_up(max(d_pad, 4 * HP, a_pad), _LANE)

    def row(v):
        return jnp.pad(v, ((0, 0), (0, P - v.shape[1])))

    vecs = jnp.concatenate([
        row(p["ln0_w"]), row(p["ln0_b"]),
        row(p["b1"]), row(p["ln1_w"]), row(p["ln1_b"]),
        row(p["b2"]), row(p["ln2_w"]), row(p["ln2_b"]),
        row(b_g),
        row(p["ln3_w"]), row(p["ln3_b"]),
        row(b3),
    ], axis=0).astype(jnp.float32)
    vecs = jnp.pad(vecs, ((0, _N_VEC_ROWS - vecs.shape[0]), (0, 0)))
    return w1, w2, w_g, w3, vecs


@jax.jit
def rnn_agent_happo_forward(params, inputs, hidden_states, masks):
    """inputs: (B, D_in); hidden_states: (B, 1, H); masks: (B, 1)."""
    B, d_in = inputs.shape
    H = params["w1"].shape[1]
    A = params["w3"].shape[1]

    D_pad = _round_up(d_in, 8)
    HP = _round_up(H, _LANE)
    A_pad = _round_up(A, _LANE)

    B8 = _round_up(B, 8)
    TB = _choose_tile(B8)
    B_pad = _round_up(B8, TB)

    x_pad = jnp.pad(inputs, ((0, B_pad - B), (0, D_pad - d_in)))
    h0 = jnp.pad(hidden_states.reshape(B, H), ((0, B_pad - B), (0, HP - H)))
    m_pad = jnp.pad(masks, ((0, B_pad - B), (0, 0)))

    w1, w2, w_g, w3, vecs = _pack_params(params, d_in, D_pad, H, HP, A_pad)
    P = vecs.shape[1]

    grid = (B_pad // TB,)
    kernel = functools.partial(_happo_kernel, d_in=d_in, hidden=H)

    def resident(shape):
        # Grid-invariant weights: keep a single VMEM copy (no double buffer).
        return pl.BlockSpec(shape, lambda i: (0, 0),
                            pipeline_mode=pl.Buffered(1))

    def batched(shape):
        return pl.BlockSpec(shape, lambda i: (i, 0))

    flops = 2 * B_pad * (D_pad * HP + HP * HP + 2 * HP * 4 * HP + HP * A_pad)
    transcendentals = B_pad * (3 * HP + 4)
    bytes_accessed = (4 * (x_pad.size + 2 * h0.size + m_pad.size + vecs.size
                           + B_pad * A_pad)
                      + 2 * (w1.size + w2.size + w_g.size + w3.size))

    q_pad, h_new = pl.pallas_call(
        kernel,
        grid=grid,
        in_specs=[
            batched((TB, D_pad)),        # x
            batched((TB, HP)),           # h0 (lane-padded)
            batched((TB, 1)),            # masks
            resident((D_pad, HP)),       # w1
            resident((HP, HP)),          # w2
            resident((2 * HP, 4 * HP)),  # fused, gate-aligned GRU weights
            resident((HP, A_pad)),       # w3 (column-padded)
            resident((_N_VEC_ROWS, P)),  # packed small parameters (f32)
        ],
        out_specs=(
            batched((TB, A_pad)),
            batched((TB, HP)),
        ),
        out_shape=(
            jax.ShapeDtypeStruct((B_pad, A_pad), jnp.float32),
            jax.ShapeDtypeStruct((B_pad, HP), jnp.float32),
        ),
        input_output_aliases={1: 1},     # reuse padded h0 buffer for h_new
        compiler_params=pltpu.CompilerParams(
            dimension_semantics=("parallel",),
            vmem_limit_bytes=64 * 1024 * 1024),
        cost_estimate=pl.CostEstimate(flops=flops,
                                      transcendentals=transcendentals,
                                      bytes_accessed=bytes_accessed),
    )(x_pad, h0, m_pad, w1, w2, w_g, w3, vecs)

    # h.transpose(0, 1) in the PyTorch code -> (B, 1, H); drop all padding.
    return q_pad[:B, :A], h_new[:B, :H].reshape(B, 1, H)


def _reference_forward(params, inputs, hidden_states, masks):
    """Pure-JAX f32 reference mirroring the PyTorch forward (single-step)."""
    p = params

    def ln(v, w, b):
        mu = jnp.mean(v, axis=-1, keepdims=True)
        var = jnp.mean((v - mu) ** 2, axis=-1, keepdims=True)
        return (v - mu) * jax.lax.rsqrt(var + _EPS) * w + b

    x = ln(inputs, p["ln0_w"], p["ln0_b"])
    x = ln(jnp.maximum(x @ p["w1"] + p["b1"], 0.0), p["ln1_w"], p["ln1_b"])
    x = ln(jnp.maximum(x @ p["w2"] + p["b2"], 0.0), p["ln2_w"], p["ln2_b"])
    h_prev = hidden_states[:, 0, :] * masks
    r = jax.nn.sigmoid(x @ p["w_ir"] + p["b_ir"] + h_prev @ p["w_hr"] + p["b_hr"])
    z = jax.nn.sigmoid(x @ p["w_iz"] + p["b_iz"] + h_prev @ p["w_hz"] + p["b_hz"])
    n = jnp.tanh(x @ p["w_in"] + p["b_in"] + r * (h_prev @ p["w_hn"] + p["b_hn"]))
    h_new = (1.0 - z) * n + z * h_prev
    xo = ln(h_new, p["ln3_w"], p["ln3_b"])
    q = xo @ p["w3"] + p["b3"]
    return q, h_new[:, None, :]


def make_params(key, d_in, hidden, n_actions):
    """Deterministic synthetic parameters (shapes match the PyTorch module)."""
    keys = jax.random.split(key, 32)

    def w(k, shape, scale):
        return (scale * jax.random.normal(k, shape)).astype(jnp.float32)

    H = hidden
    params = {
        "ln0_w": 1.0 + w(keys[9], (1, d_in), 0.05),
        "ln0_b": w(keys[10], (1, d_in), 0.05),
        "w1": w(keys[0], (d_in, H), 0.1),
        "b1": w(keys[11], (1, H), 0.05),
        "ln1_w": 1.0 + w(keys[12], (1, H), 0.05),
        "ln1_b": w(keys[13], (1, H), 0.05),
        "w2": w(keys[1], (H, H), 0.1),
        "b2": w(keys[14], (1, H), 0.05),
        "ln2_w": 1.0 + w(keys[15], (1, H), 0.05),
        "ln2_b": w(keys[16], (1, H), 0.05),
        "w_ir": w(keys[2], (H, H), 0.1),
        "w_iz": w(keys[3], (H, H), 0.1),
        "w_in": w(keys[4], (H, H), 0.1),
        "w_hr": w(keys[5], (H, H), 0.1),
        "w_hz": w(keys[6], (H, H), 0.1),
        "w_hn": w(keys[7], (H, H), 0.1),
        "b_ir": w(keys[17], (1, H), 0.05),
        "b_iz": w(keys[18], (1, H), 0.05),
        "b_in": w(keys[19], (1, H), 0.05),
        "b_hr": w(keys[20], (1, H), 0.05),
        "b_hz": w(keys[21], (1, H), 0.05),
        "b_hn": w(keys[22], (1, H), 0.05),
        "ln3_w": 1.0 + w(keys[23], (1, H), 0.05),
        "ln3_b": w(keys[24], (1, H), 0.05),
        "w3": w(keys[8], (H, n_actions), 0.01),
        "b3": w(keys[25], (1, n_actions), 0.01),
    }
    return params


if __name__ == "__main__":
    B, D_IN, HIDDEN, N_ACTIONS = 8, 30, 32, 5

    key = jax.random.PRNGKey(0)
    k_x, k_h, k_m, k_p = jax.random.split(key, 4)

    inputs = jax.random.normal(k_x, (B, D_IN), dtype=jnp.float32)
    hidden_states = jax.random.normal(k_h, (B, 1, HIDDEN), dtype=jnp.float32)
    masks = (jax.random.uniform(k_m, (B, 1)) > 0.25).astype(jnp.float32)

    params = make_params(k_p, D_IN, HIDDEN, N_ACTIONS)

    q, h = rnn_agent_happo_forward(params, inputs, hidden_states, masks)
    q, h = jax.block_until_ready((q, h))

    q_ref, h_ref = _reference_forward(params, inputs, hidden_states, masks)
    assert q.shape == (B, N_ACTIONS) and h.shape == (B, 1, HIDDEN)
    # bf16 MXU operands (f32 accumulation) -> compare to the f32 reference
    # with bf16-appropriate tolerances.
    assert jnp.allclose(q, q_ref, atol=5e-2, rtol=5e-2)
    assert jnp.allclose(h, h_ref, atol=5e-2, rtol=5e-2)

    # TODO(synk): the multi-segment sequence branch of forward() (mask-driven
    # `has_zeros` chunking with a host-side Python loop over segments) is
    # data-dependent control flow and is not implemented in the kernel.
    print("KERNEL_OK")
</pallas_src>

<mosaic_0001>
module attributes {stable_mosaic.version = 11 : i64} {
  func.func @_happo_kernel(%arg0: i32, %arg1: memref<8x32xf32, #tpu.memory_space<vmem>>, %arg2: memref<8x128xf32, #tpu.memory_space<vmem>>, %arg3: memref<8x1xf32, #tpu.memory_space<vmem>>, %arg4: memref<32x128xbf16, #tpu.memory_space<vmem>>, %arg5: memref<128x128xbf16, #tpu.memory_space<vmem>>, %arg6: memref<256x512xbf16, #tpu.memory_space<vmem>>, %arg7: memref<128x128xbf16, #tpu.memory_space<vmem>>, %arg8: memref<16x512xf32, #tpu.memory_space<vmem>>, %arg9: memref<8x128xf32, #tpu.memory_space<vmem>>, %arg10: memref<8x128xf32, #tpu.memory_space<vmem>>) attributes {dimension_semantics = [#tpu.dimension_semantics<parallel>], iteration_bounds = array<i64: 1>, scalar_prefetch = 0 : i64, scratch_operands = 0 : i64, tpu.core_type = #tpu.core_type<tc>, window_params = [{transform_indices = @transform_0, window_bounds = array<i64: 8, 32>}, {transform_indices = @transform_1, window_bounds = array<i64: 8, 128>}, {transform_indices = @transform_2, window_bounds = array<i64: 8, 1>}, {pipeline_mode = #tpu.pipeline_mode<synchronous>, transform_indices = @transform_3, window_bounds = array<i64: 32, 128>}, {pipeline_mode = #tpu.pipeline_mode<synchronous>, transform_indices = @transform_4, window_bounds = array<i64: 128, 128>}, {pipeline_mode = #tpu.pipeline_mode<synchronous>, transform_indices = @transform_5, window_bounds = array<i64: 256, 512>}, {pipeline_mode = #tpu.pipeline_mode<synchronous>, transform_indices = @transform_6, window_bounds = array<i64: 128, 128>}, {pipeline_mode = #tpu.pipeline_mode<synchronous>, transform_indices = @transform_7, window_bounds = array<i64: 16, 512>}, {transform_indices = @transform_8, window_bounds = array<i64: 8, 128>}, {transform_indices = @transform_9, window_bounds = array<i64: 8, 128>}]} {
    %c0 = arith.constant 0 : index
    %c0_0 = arith.constant 0 : index
    %0 = vector.load %arg1[%c0, %c0_0] : memref<8x32xf32, #tpu.memory_space<vmem>>, vector<8x32xf32>
    %c0_1 = arith.constant 0 : index
    %c0_2 = arith.constant 0 : index
    %1 = vector.load %arg8[%c0_1, %c0_2] : memref<16x512xf32, #tpu.memory_space<vmem>>, vector<1x32xf32>
    %c1 = arith.constant 1 : index
    %c0_3 = arith.constant 0 : index
    %2 = vector.load %arg8[%c1, %c0_3] : memref<16x512xf32, #tpu.memory_space<vmem>>, vector<1x32xf32>
    %cst = arith.constant dense<0.000000e+00> : vector<8xf32>
    %3 = vector.multi_reduction <add>, %0, %cst [1] : vector<8x32xf32> to vector<8xf32>
    %4 = vector.shape_cast %3 : vector<8xf32> to vector<8x1xf32>
    %5 = arith.mulf %0, %0 : vector<8x32xf32>
    %cst_4 = arith.constant dense<0.000000e+00> : vector<8xf32>
    %6 = vector.multi_reduction <add>, %5, %cst_4 [1] : vector<8x32xf32> to vector<8xf32>
    %7 = vector.shape_cast %6 : vector<8xf32> to vector<8x1xf32>
    %cst_5 = arith.constant 0.0333333351 : f32
    %8 = vector.broadcast %cst_5 : f32 to vector<8x1xf32>
    %9 = arith.mulf %4, %8 : vector<8x1xf32>
    %cst_6 = arith.constant 0.0333333351 : f32
    %10 = vector.broadcast %cst_6 : f32 to vector<8x1xf32>
    %11 = arith.mulf %7, %10 : vector<8x1xf32>
    %12 = arith.mulf %9, %9 : vector<8x1xf32>
    %13 = arith.subf %11, %12 : vector<8x1xf32>
    %14 = vector.broadcast %9 : vector<8x1xf32> to vector<8x32xf32>
    %15 = arith.subf %0, %14 : vector<8x32xf32>
    %cst_7 = arith.constant 9.99999974E-6 : f32
    %16 = vector.broadcast %cst_7 : f32 to vector<8x1xf32>
    %17 = arith.addf %13, %16 : vector<8x1xf32>
    %18 = math.rsqrt %17 : vector<8x1xf32>
    %19 = vector.broadcast %18 : vector<8x1xf32> to vector<8x32xf32>
    %20 = arith.mulf %15, %19 : vector<8x32xf32>
    %21 = vector.broadcast %1 : vector<1x32xf32> to vector<8x32xf32>
    %22 = arith.mulf %20, %21 : vector<8x32xf32>
    %23 = vector.broadcast %2 : vector<1x32xf32> to vector<8x32xf32>
    %24 = arith.addf %22, %23 : vector<8x32xf32>
    %c2 = arith.constant 2 : index
    %c0_8 = arith.constant 0 : index
    %25 = vector.load %arg8[%c2, %c0_8] : memref<16x512xf32, #tpu.memory_space<vmem>>, vector<1x128xf32>
    %26 = arith.truncf %24 : vector<8x32xf32> to vector<8x32xbf16>
    %c0_9 = arith.constant 0 : index
    %c0_10 = arith.constant 0 : index
    %27 = vector.load %arg4[%c0_9, %c0_10] : memref<32x128xbf16, #tpu.memory_space<vmem>>, vector<32x128xbf16>
    %cst_11 = arith.constant dense<0.000000e+00> : vector<8x128xf32>
    %28 = tpu.matmul %26, %27, %cst_11 {dimension_numbers = #tpu.dot_dimension_numbers<[1], [0], [0], [1], [0, 0, 1, 1], [], []>} : vector<8x32xbf16>, vector<32x128xbf16>, vector<8x128xf32> -> vector<8x128xf32>
    %29 = vector.broadcast %25 : vector<1x128xf32> to vector<8x128xf32>
    %30 = arith.addf %28, %29 : vector<8x128xf32>
    %cst_12 = arith.constant 0.000000e+00 : f32
    %31 = vector.broadcast %cst_12 : f32 to vector<8x128xf32>
    %32 = arith.maximumf %30, %31 : vector<8x128xf32>
    %c3 = arith.constant 3 : index
    %c0_13 = arith.constant 0 : index
    %33 = vector.load %arg8[%c3, %c0_13] : memref<16x512xf32, #tpu.memory_space<vmem>>, vector<1x128xf32>
    %c4 = arith.constant 4 : index
    %c0_14 = arith.constant 0 : index
    %34 = vector.load %arg8[%c4, %c0_14] : memref<16x512xf32, #tpu.memory_space<vmem>>, vector<1x128xf32>
    %cst_15 = arith.constant dense<0.000000e+00> : vector<8xf32>
    %35 = vector.multi_reduction <add>, %32, %cst_15 [1] : vector<8x128xf32> to vector<8xf32>
    %36 = vector.shape_cast %35 : vector<8xf32> to vector<8x1xf32>
    %37 = arith.mulf %32, %32 : vector<8x128xf32>
    %cst_16 = arith.constant dense<0.000000e+00> : vector<8xf32>
    %38 = vector.multi_reduction <add>, %37, %cst_16 [1] : vector<8x128xf32> to vector<8xf32>
    %39 = vector.shape_cast %38 : vector<8xf32> to vector<8x1xf32>
    %cst_17 = arith.constant 3.125000e-02 : f32
    %40 = vector.broadcast %cst_17 : f32 to vector<8x1xf32>
    %41 = arith.mulf %36, %40 : vector<8x1xf32>
    %cst_18 = arith.constant 3.125000e-02 : f32
    %42 = vector.broadcast %cst_18 : f32 to vector<8x1xf32>
    %43 = arith.mulf %39, %42 : vector<8x1xf32>
    %44 = arith.mulf %41, %41 : vector<8x1xf32>
    %45 = arith.subf %43, %44 : vector<8x1xf32>
    %46 = vector.broadcast %41 : vector<8x1xf32> to vector<8x128xf32>
    %47 = arith.subf %32, %46 : vector<8x128xf32>
    %cst_19 = arith.constant 9.99999974E-6 : f32
    %48 = vector.broadcast %cst_19 : f32 to vector<8x1xf32>
    %49 = arith.addf %45, %48 : vector<8x1xf32>
    %50 = math.rsqrt %49 : vector<8x1xf32>
    %51 = vector.broadcast %50 : vector<8x1xf32> to vector<8x128xf32>
    %52 = arith.mulf %47, %51 : vector<8x128xf32>
    %53 = vector.broadcast %33 : vector<1x128xf32> to vector<8x128xf32>
    %54 = arith.mulf %52, %53 : vector<8x128xf32>
    %55 = vector.broadcast %34 : vector<1x128xf32> to vector<8x128xf32>
    %56 = arith.addf %54, %55 : vector<8x128xf32>
    %c5 = arith.constant 5 : index
    %c0_20 = arith.constant 0 : index
    %57 = vector.load %arg8[%c5, %c0_20] : memref<16x512xf32, #tpu.memory_space<vmem>>, vector<1x128xf32>
    %58 = arith.truncf %56 : vector<8x128xf32> to vector<8x128xbf16>
    %c0_21 = arith.constant 0 : index
    %c0_22 = arith.constant 0 : index
    %59 = vector.load %arg5[%c0_21, %c0_22] : memref<128x128xbf16, #tpu.memory_space<vmem>>, vector<128x128xbf16>
    %cst_23 = arith.constant dense<0.000000e+00> : vector<8x128xf32>
    %60 = tpu.matmul %58, %59, %cst_23 {dimension_numbers = #tpu.dot_dimension_numbers<[1], [0], [0], [1], [0, 0, 1, 1], [], []>} : vector<8x128xbf16>, vector<128x128xbf16>, vector<8x128xf32> -> vector<8x128xf32>
    %61 = vector.broadcast %57 : vector<1x128xf32> to vector<8x128xf32>
    %62 = arith.addf %60, %61 : vector<8x128xf32>
    %cst_24 = arith.constant 0.000000e+00 : f32
    %63 = vector.broadcast %cst_24 : f32 to vector<8x128xf32>
    %64 = arith.maximumf %62, %63 : vector<8x128xf32>
    %c6 = arith.constant 6 : index
    %c0_25 = arith.constant 0 : index
    %65 = vector.load %arg8[%c6, %c0_25] : memref<16x512xf32, #tpu.memory_space<vmem>>, vector<1x128xf32>
    %c7 = arith.constant 7 : index
    %c0_26 = arith.constant 0 : index
    %66 = vector.load %arg8[%c7, %c0_26] : memref<16x512xf32, #tpu.memory_space<vmem>>, vector<1x128xf32>
    %cst_27 = arith.constant dense<0.000000e+00> : vector<8xf32>
    %67 = vector.multi_reduction <add>, %64, %cst_27 [1] : vector<8x128xf32> to vector<8xf32>
    %68 = vector.shape_cast %67 : vector<8xf32> to vector<8x1xf32>
    %69 = arith.mulf %64, %64 : vector<8x128xf32>
    %cst_28 = arith.constant dense<0.000000e+00> : vector<8xf32>
    %70 = vector.multi_reduction <add>, %69, %cst_28 [1] : vector<8x128xf32> to vector<8xf32>
    %71 = vector.shape_cast %70 : vector<8xf32> to vector<8x1xf32>
    %cst_29 = arith.constant 3.125000e-02 : f32
    %72 = vector.broadcast %cst_29 : f32 to vector<8x1xf32>
    %73 = arith.mulf %68, %72 : vector<8x1xf32>
    %cst_30 = arith.constant 3.125000e-02 : f32
    %74 = vector.broadcast %cst_30 : f32 to vector<8x1xf32>
    %75 = arith.mulf %71, %74 : vector<8x1xf32>
    %76 = arith.mulf %73, %73 : vector<8x1xf32>
    %77 = arith.subf %75, %76 : vector<8x1xf32>
    %78 = vector.broadcast %73 : vector<8x1xf32> to vector<8x128xf32>
    %79 = arith.subf %64, %78 : vector<8x128xf32>
    %cst_31 = arith.constant 9.99999974E-6 : f32
    %80 = vector.broadcast %cst_31 : f32 to vector<8x1xf32>
    %81 = arith.addf %77, %80 : vector<8x1xf32>
    %82 = math.rsqrt %81 : vector<8x1xf32>
    %83 = vector.broadcast %82 : vector<8x1xf32> to vector<8x128xf32>
    %84 = arith.mulf %79, %83 : vector<8x128xf32>
    %85 = vector.broadcast %65 : vector<1x128xf32> to vector<8x128xf32>
    %86 = arith.mulf %84, %85 : vector<8x128xf32>
    %87 = vector.broadcast %66 : vector<1x128xf32> to vector<8x128xf32>
    %88 = arith.addf %86, %87 : vector<8x128xf32>
    %c0_32 = arith.constant 0 : index
    %c0_33 = arith.constant 0 : index
    %89 = vector.load %arg2[%c0_32, %c0_33] : memref<8x128xf32, #tpu.memory_space<vmem>>, vector<8x128xf32>
    %c0_34 = arith.constant 0 : index
    %c0_35 = arith.constant 0 : index
    %90 = vector.load %arg3[%c0_34, %c0_35] : memref<8x1xf32, #tpu.memory_space<vmem>>, vector<8x1xf32>
    %91 = vector.broadcast %90 : vector<8x1xf32> to vector<8x128xf32>
    %92 = arith.mulf %89, %91 : vector<8x128xf32>
    %93 = tpu.concatenate %88, %92 in 1 : vector<8x128xf32>, vector<8x128xf32> -> vector<8x256xf32>
    %c8 = arith.constant 8 : index
    %c0_36 = arith.constant 0 : index
    %94 = vector.load %arg8[%c8, %c0_36] : memref<16x512xf32, #tpu.memory_space<vmem>>, vector<1x512xf32>
    %95 = arith.truncf %93 : vector<8x256xf32> to vector<8x256xbf16>
    %c0_37 = arith.constant 0 : index
    %c0_38 = arith.constant 0 : index
    %96 = vector.load %arg6[%c0_37, %c0_38] : memref<256x512xbf16, #tpu.memory_space<vmem>>, vector<256x512xbf16>
    %cst_39 = arith.constant dense<0.000000e+00> : vector<8x512xf32>
    %97 = tpu.matmul %95, %96, %cst_39 {dimension_numbers = #tpu.dot_dimension_numbers<[1], [0], [0], [1], [0, 0, 1, 1], [], []>} : vector<8x256xbf16>, vector<256x512xbf16>, vector<8x512xf32> -> vector<8x512xf32>
    %98 = vector.broadcast %94 : vector<1x512xf32> to vector<8x512xf32>
    %99 = arith.addf %97, %98 : vector<8x512xf32>
    %100 = vector.extract_strided_slice %99 {offsets = [0, 0], sizes = [8, 128], strides = [1, 1]} : vector<8x512xf32> to vector<8x128xf32>
    %101 = arith.negf %100 : vector<8x128xf32>
    %102 = math.exp %101 : vector<8x128xf32>
    %cst_40 = arith.constant 1.000000e+00 : f32
    %103 = vector.broadcast %cst_40 : f32 to vector<8x128xf32>
    %104 = arith.addf %103, %102 : vector<8x128xf32>
    %105 = arith.divf %103, %104 : vector<8x128xf32>
    %106 = vector.extract_strided_slice %99 {offsets = [0, 128], sizes = [8, 128], strides = [1, 1]} : vector<8x512xf32> to vector<8x128xf32>
    %107 = arith.negf %106 : vector<8x128xf32>
    %108 = math.exp %107 : vector<8x128xf32>
    %cst_41 = arith.constant 1.000000e+00 : f32
    %109 = vector.broadcast %cst_41 : f32 to vector<8x128xf32>
    %110 = arith.addf %109, %108 : vector<8x128xf32>
    %111 = arith.divf %109, %110 : vector<8x128xf32>
    %112 = vector.extract_strided_slice %99 {offsets = [0, 256], sizes = [8, 128], strides = [1, 1]} : vector<8x512xf32> to vector<8x128xf32>
    %113 = vector.extract_strided_slice %99 {offsets = [0, 384], sizes = [8, 128], strides = [1, 1]} : vector<8x512xf32> to vector<8x128xf32>
    %114 = arith.mulf %105, %113 : vector<8x128xf32>
    %115 = arith.addf %112, %114 : vector<8x128xf32>
    %116 = math.tanh %115 : vector<8x128xf32>
    %cst_42 = arith.constant 1.000000e+00 : f32
    %117 = vector.broadcast %cst_42 : f32 to vector<8x128xf32>
    %118 = arith.subf %117, %111 : vector<8x128xf32>
    %119 = arith.mulf %118, %116 : vector<8x128xf32>
    %120 = arith.mulf %111, %92 : vector<8x128xf32>
    %121 = arith.addf %119, %120 : vector<8x128xf32>
    %c0_43 = arith.constant 0 : index
    %c0_44 = arith.constant 0 : index
    %122 = vector.load %arg10[%c0_43, %c0_44] : memref<8x128xf32, #tpu.memory_space<vmem>>, vector<8x128xf32>
    tpu.vector_store %arg10[%c0_43, %c0_44], %121 {strides = array<i32>} : memref<8x128xf32, #tpu.memory_space<vmem>>, vector<8x128xf32>,
    %c9 = arith.constant 9 : index
    %c0_45 = arith.constant 0 : index
    %123 = vector.load %arg8[%c9, %c0_45] : memref<16x512xf32, #tpu.memory_space<vmem>>, vector<1x128xf32>
    %c10 = arith.constant 10 : index
    %c0_46 = arith.constant 0 : index
    %124 = vector.load %arg8[%c10, %c0_46] : memref<16x512xf32, #tpu.memory_space<vmem>>, vector<1x128xf32>
    %cst_47 = arith.constant dense<0.000000e+00> : vector<8xf32>
    %125 = vector.multi_reduction <add>, %121, %cst_47 [1] : vector<8x128xf32> to vector<8xf32>
    %126 = vector.shape_cast %125 : vector<8xf32> to vector<8x1xf32>
    %127 = arith.mulf %121, %121 : vector<8x128xf32>
    %cst_48 = arith.constant dense<0.000000e+00> : vector<8xf32>
    %128 = vector.multi_reduction <add>, %127, %cst_48 [1] : vector<8x128xf32> to vector<8xf32>
    %129 = vector.shape_cast %128 : vector<8xf32> to vector<8x1xf32>
    %cst_49 = arith.constant 3.125000e-02 : f32
    %130 = vector.broadcast %cst_49 : f32 to vector<8x1xf32>
    %131 = arith.mulf %126, %130 : vector<8x1xf32>
    %cst_50 = arith.constant 3.125000e-02 : f32
    %132 = vector.broadcast %cst_50 : f32 to vector<8x1xf32>
    %133 = arith.mulf %129, %132 : vector<8x1xf32>
    %134 = arith.mulf %131, %131 : vector<8x1xf32>
    %135 = arith.subf %133, %134 : vector<8x1xf32>
    %136 = vector.broadcast %131 : vector<8x1xf32> to vector<8x128xf32>
    %137 = arith.subf %121, %136 : vector<8x128xf32>
    %cst_51 = arith.constant 9.99999974E-6 : f32
    %138 = vector.broadcast %cst_51 : f32 to vector<8x1xf32>
    %139 = arith.addf %135, %138 : vector<8x1xf32>
    %140 = math.rsqrt %139 : vector<8x1xf32>
    %141 = vector.broadcast %140 : vector<8x1xf32> to vector<8x128xf32>
    %142 = arith.mulf %137, %141 : vector<8x128xf32>
    %143 = vector.broadcast %123 : vector<1x128xf32> to vector<8x128xf32>
    %144 = arith.mulf %142, %143 : vector<8x128xf32>
    %145 = vector.broadcast %124 : vector<1x128xf32> to vector<8x128xf32>
    %146 = arith.addf %144, %145 : vector<8x128xf32>
    %c11 = arith.constant 11 : index
    %c0_52 = arith.constant 0 : index
    %147 = vector.load %arg8[%c11, %c0_52] : memref<16x512xf32, #tpu.memory_space<vmem>>, vector<1x128xf32>
    %148 = arith.truncf %146 : vector<8x128xf32> to vector<8x128xbf16>
    %c0_53 = arith.constant 0 : index
    %c0_54 = arith.constant 0 : index
    %149 = vector.load %arg7[%c0_53, %c0_54] : memref<128x128xbf16, #tpu.memory_space<vmem>>, vector<128x128xbf16>
    %cst_55 = arith.constant dense<0.000000e+00> : vector<8x128xf32>
    %150 = tpu.matmul %148, %149, %cst_55 {dimension_numbers = #tpu.dot_dimension_numbers<[1], [0], [0], [1], [0, 0, 1, 1], [], []>} : vector<8x128xbf16>, vector<128x128xbf16>, vector<8x128xf32> -> vector<8x128xf32>
    %151 = vector.broadcast %147 : vector<1x128xf32> to vector<8x128xf32>
    %152 = arith.addf %150, %151 : vector<8x128xf32>
    %c0_56 = arith.constant 0 : index
    %c0_57 = arith.constant 0 : index
    %153 = vector.load %arg9[%c0_56, %c0_57] : memref<8x128xf32, #tpu.memory_space<vmem>>, vector<8x128xf32>
    tpu.vector_store %arg9[%c0_56, %c0_57], %152 {strides = array<i32>} : memref<8x128xf32, #tpu.memory_space<vmem>>, vector<8x128xf32>,
    return
  }
  func.func @transform_0(%arg0: i32) -> (i32, i32) {
    %c0_i32 = arith.constant 0 : i32
    %c0_i32_0 = arith.constant 0 : i32
    return %arg0, %c0_i32 : i32, i32
  }
  func.func @transform_1(%arg0: i32) -> (i32, i32) {
    %c0_i32 = arith.constant 0 : i32
    %c0_i32_0 = arith.constant 0 : i32
    return %arg0, %c0_i32 : i32, i32
  }
  func.func @transform_2(%arg0: i32) -> (i32, i32) {
    %c0_i32 = arith.constant 0 : i32
    %c0_i32_0 = arith.constant 0 : i32
    return %arg0, %c0_i32 : i32, i32
  }
  func.func @transform_3(%arg0: i32) -> (i32, i32) {
    %c0_i32 = arith.constant 0 : i32
    %c0_i32_0 = arith.constant 0 : i32
    %c0_i32_1 = arith.constant 0 : i32
    return %c0_i32, %c0_i32_0 : i32, i32
  }
  func.func @transform_4(%arg0: i32) -> (i32, i32) {
    %c0_i32 = arith.constant 0 : i32
    %c0_i32_0 = arith.constant 0 : i32
    %c0_i32_1 = arith.constant 0 : i32
    return %c0_i32, %c0_i32_0 : i32, i32
  }
  func.func @transform_5(%arg0: i32) -> (i32, i32) {
    %c0_i32 = arith.constant 0 : i32
    %c0_i32_0 = arith.constant 0 : i32
    %c0_i32_1 = arith.constant 0 : i32
    return %c0_i32, %c0_i32_0 : i32, i32
  }
  func.func @transform_6(%arg0: i32) -> (i32, i32) {
    %c0_i32 = arith.constant 0 : i32
    %c0_i32_0 = arith.constant 0 : i32
    %c0_i32_1 = arith.constant 0 : i32
    return %c0_i32, %c0_i32_0 : i32, i32
  }
  func.func @transform_7(%arg0: i32) -> (i32, i32) {
    %c0_i32 = arith.constant 0 : i32
    %c0_i32_0 = arith.constant 0 : i32
    %c0_i32_1 = arith.constant 0 : i32
    return %c0_i32, %c0_i32_0 : i32, i32
  }
  func.func @transform_8(%arg0: i32) -> (i32, i32) {
    %c0_i32 = arith.constant 0 : i32
    %c0_i32_0 = arith.constant 0 : i32
    return %arg0, %c0_i32 : i32, i32
  }
  func.func @transform_9(%arg0: i32) -> (i32, i32) {
    %c0_i32 = arith.constant 0 : i32
    %c0_i32_0 = arith.constant 0 : i32
    return %arg0, %c0_i32 : i32, i32
  }
}

</mosaic_0001>

<llo_original>
// kernel: rnn_agent_happo_forward.1
$region0: #{rnn_agent_happo_forward.1}
  #allocation0 [shape = 'u32[]', space=smem, size = 0x4, offset = 0x4, fixed_abs, tag = 'smem constant byte address 0x4 - core index']
  #allocation1 [shape = 'u32[144,128]{1,0:T(1,128)}', space=vmem, size = 0x12000, scoped, tag = 'internal scratch']
  %s0 = inlined_call_operand.vmem [shape: f32[8,32], index: 0, kind: input, shape index: {}]
  %s1 = inlined_call_operand.vmem [shape: f32[8,128], index: 1, kind: input, shape index: {}, may-alias: {1,9}]
  %s2 = inlined_call_operand.vmem [shape: f32[8,1], index: 2, kind: input, shape index: {}]
  %s3 = inlined_call_operand.vmem [shape: bf16[32,128], index: 3, kind: input, shape index: {}]
  %s4 = inlined_call_operand.vmem [shape: bf16[128,128], index: 4, kind: input, shape index: {}]
  %s5 = inlined_call_operand.vmem [shape: bf16[256,512], index: 5, kind: input, shape index: {}]
  %s6 = inlined_call_operand.vmem [shape: bf16[128,128], index: 6, kind: input, shape index: {}]
  %s7 = inlined_call_operand.vmem [shape: f32[16,512], index: 7, kind: input, shape index: {}]
  %s8 = inlined_call_operand.hbm [shape: f32[8,128], index: 8, kind: output, shape index: {0}]
  %s9 = inlined_call_operand.vmem [shape: f32[8,128], index: 9, kind: output, shape index: {1}, may-alias: {1,9}]
  %10 = xla_tuple %s8, %s9
  %s11 = sld [smem:[#allocation0]]
  $region50: #{rnn_agent_happo_forward.1} parent=0
    _
  %s13 = ssub.s32 1, %s11
  %s14 = scalar_select 0, %s13, %s11
  $region1: #{rnn_agent_happo_forward.1} parent=0
    #allocation2 [shape = 'u8[4096]{0}', space=vmem, size = 0x1000, scoped, tag = 'output window, operand 0, single buffered']
    #allocation3 [shape = 's32[1]{0}', space=sflag, size = 0x4, scoped, tag = 'scoped memory for rnn_agent_happo_forward.1']
    %15 = vsyncpa [#allocation3], 0
    // Predicated region
    $region2: #{rnn_agent_happo_forward.1} parent=1 // pred_check
      _
    $region3: #{rnn_agent_happo_forward.1} parent=1 // pred_check_branch
      %17 = sbr.rel (0) target = $region5
    $region4: #{rnn_agent_happo_forward.1} parent=1 // pred_region
      _
    $region5: #{rnn_agent_happo_forward.1} parent=1 // pred_fallthru
      _
    // Predicated region
    $region6: #{rnn_agent_happo_forward.1} parent=1 // pred_check
      _
    $region7: #{rnn_agent_happo_forward.1} parent=1 // pred_check_branch
      %19 = sbr.rel (0) target = $region9
    $region8: #{rnn_agent_happo_forward.1} parent=1 // pred_region
      _
    $region9: #{rnn_agent_happo_forward.1} parent=1 // pred_fallthru
      _
    // Predicated region
    $region10: #{rnn_agent_happo_forward.1} parent=1 // pred_check
      _
    $region11: #{rnn_agent_happo_forward.1} parent=1 // pred_check_branch
      %21 = sbr.rel (0) target = $region13
    $region12: #{rnn_agent_happo_forward.1} parent=1 // pred_region
      _
    $region13: #{rnn_agent_happo_forward.1} parent=1 // pred_fallthru
      _
    // Predicated region
    $region14: #{rnn_agent_happo_forward.1} parent=1 // pred_check
      _
    $region15: #{rnn_agent_happo_forward.1} parent=1 // pred_check_branch
      %23 = sbr.rel (0) target = $region17
    $region16: #{rnn_agent_happo_forward.1} parent=1 // pred_region
      _
    $region17: #{rnn_agent_happo_forward.1} parent=1 // pred_fallthru
      _
    // Predicated region
    $region18: #{rnn_agent_happo_forward.1} parent=1 // pred_check
      _
    $region19: #{rnn_agent_happo_forward.1} parent=1 // pred_check_branch
      %25 = sbr.rel (0) target = $region21
    $region20: #{rnn_agent_happo_forward.1} parent=1 // pred_region
      _
    $region21: #{rnn_agent_happo_forward.1} parent=1 // pred_fallthru
      _
    // Predicated region
    $region22: #{rnn_agent_happo_forward.1} parent=1 // pred_check
      _
    $region23: #{rnn_agent_happo_forward.1} parent=1 // pred_check_branch
      %27 = sbr.rel (0) target = $region25
    $region24: #{rnn_agent_happo_forward.1} parent=1 // pred_region
      _
    $region25: #{rnn_agent_happo_forward.1} parent=1 // pred_fallthru
      _
    // Predicated region
    $region26: #{rnn_agent_happo_forward.1} parent=1 // pred_check
      _
    $region27: #{rnn_agent_happo_forward.1} parent=1 // pred_check_branch
      %29 = sbr.rel (0) target = $region29
    $region28: #{rnn_agent_happo_forward.1} parent=1 // pred_region
      _
    $region29: #{rnn_agent_happo_forward.1} parent=1 // pred_fallthru
      _
    // Predicated region
    $region30: #{rnn_agent_happo_forward.1} parent=1 // pred_check
      _
    $region31: #{rnn_agent_happo_forward.1} parent=1 // pred_check_branch
      %31 = sbr.rel (0) target = $region33
    $region32: #{rnn_agent_happo_forward.1} parent=1 // pred_region
      _
    $region33: #{rnn_agent_happo_forward.1} parent=1 // pred_fallthru
      _
    %v33 = vld [vmem:[%s0] sm:$0xff]
    %v34 = vld [vmem:[%s7] ss:$0 sm:$0xff]
    %v35 = vld [vmem:[%s7 + $0x1] ss:$0 sm:$0xff]
    %vm36 = vcmask 261120
    %v37 = vsel %vm36, %v33, 0.0
    %38 = vadd.xlane.f32.xlu0 %v37
    %v39 = vpop.xlane.xlu0 %38
    %v40 = vmul.f32 %v33, %v33
    %v41 = vsel %vm36, %v40, 0.0
    %42 = vadd.xlane.f32.xlu0 %v41
    %v43 = vpop.xlane.xlu0 %42
    %v44 = vmul.f32 %v39, 0.033333335
    %v45 = vmul.f32 %v43, 0.033333335
    %v46 = vmul.f32 %v44, %v44
    %v47 = vsub.f32 %v45, %v46
    %v48 = vsub.f32 %v33, %v44
    %v49 = vadd.f32 %v47, 1e-05
    %v50 = vrsqrt.pop %v49
    %v51 = vmul.f32 %v48, %v50
    %v52 = vmul.f32 %v51, %v34
    %v53 = vadd.f32 %v52, %v35
    %v54 = vld [vmem:[%s7 + $0x2] ss:$0 sm:$0xff]
    %v55 = vpack.c.bf16 %v53, %v53
    %v56 = vld [vmem:[%s3] sm:$0xf]
    %v57 = vld [vmem:[%s3 + $0x4] sm:$0xf]
    %v58 = vld [vmem:[%s3 + $0x8] sm:$0xf]
    %v59 = vld [vmem:[%s3 + $0xc] sm:$0xf]
    %v64 = vunpack.c.l.b16 %v56
    %v65 = vunpack.c.l.b16 %v57
    %v66 = vunpack.c.l.b16 %v58
    %v67 = vunpack.c.l.b16 %v59
    %v68 = vpack.c.b16 %v65, %v64
    %v69 = vpack.c.b16 %v67, %v66
    %v73 = vsel %vm36, %v55, 0
    %75 = vmatprep.subr.bf16.mxu0 0
    %76 = vmatpush1.bf16.msra.mxu0 0
    %77 = vmatprep.subr.bf16.mxu0 0
    %78 = vmatpush1.bf16.msra.mxu0 0
    %79 = vmatprep.subr.bf16.mxu0 0
    %80 = vmatpush1.bf16.msra.mxu0 0
    %81 = vmatprep.subr.bf16.mxu0 0
    %82 = vmatpush1.bf16.msra.mxu0 0
    %83 = vmatprep.subr.bf16.mxu0 0
    %84 = vmatpush1.bf16.msra.mxu0 0
    %85 = vmatprep.subr.bf16.mxu0 0
    %86 = vmatpush1.bf16.msra.mxu0 0
    %87 = vmatprep.subr.bf16.mxu0 0
    %88 = vmatpush1.bf16.msra.mxu0 %v69
    %89 = vmatprep.subr.bf16.mxu0 0
    %90 = vmatpush1.bf16.msra.mxu0 %v68
    %91 = vmatprep.subr.bf16.mxu0 0
    %92 = vmatpush2.bf16.msra.mxu0 0
    %93 = vmatprep.subr.bf16.mxu0 0
    %94 = vmatpush2.bf16.msra.mxu0 0
    %95 = vmatprep.subr.bf16.mxu0 0
    %96 = vmatpush2.bf16.msra.mxu0 0
    %97 = vmatprep.subr.bf16.mxu0 0
    %98 = vmatpush2.bf16.msra.mxu0 0
    %99 = vmatprep.subr.bf16.mxu0 0
    %100 = vmatpush2.bf16.msra.mxu0 0
    %101 = vmatprep.subr.bf16.mxu0 0
    %102 = vmatpush2.bf16.msra.mxu0 0
    %103 = vmatprep.subr.bf16.mxu0 0
    %104 = vmatpush2.bf16.msra.mxu0 0
    %105 = vmatprep.subr.bf16.mxu0 0
    %106 = vmatpush2.bf16.msra.mxu0 0
    %107 = vmatprep.mubr.bf16.mxu0 0
    %108 = vmatmul.mubr.bf16.gmra.mxu0 %v73
    %v109 = vpop.f32.mrf.mxu0
    %v110 = vadd.f32 %v54, %v109
    %v111 = vpop.f32.mrf.mxu0
    %v112 = vpop.f32.mrf.mxu0
    %v113 = vpop.f32.mrf.mxu0
    %114 = vdwg.mxu0
    %v115 = vmax.f32 %v110, 0.0
    %v116 = vld [vmem:[%s7 + $0x3] ss:$0 sm:$0xff]
    %v117 = vld [vmem:[%s7 + $0x4] ss:$0 sm:$0xff]
    %118 = vadd.xlane.f32.xlu0 %v115
    %v119 = vpop.xlane.xlu0 %118
    %v120 = vmul.f32 %v115, %v115
    %121 = vadd.xlane.f32.xlu0 %v120
    %v122 = vpop.xlane.xlu0 %121
    %v123 = vmul.f32 %v119, 0.03125
    %v124 = vmul.f32 %v122, 0.03125
    %v125 = vmul.f32 %v123, %v123
    %v126 = vsub.f32 %v124, %v125
    %v127 = vsub.f32 %v115, %v123
    %v128 = vadd.f32 %v126, 1e-05
    %v129 = vrsqrt.pop %v128
    %v130 = vmul.f32 %v127, %v129
    %v131 = vmul.f32 %v130, %v116
    %v132 = vadd.f32 %v131, %v117
    %v133 = vld [vmem:[%s7 + $0x5] ss:$0 sm:$0xff]
    %v134 = vpack.c.bf16 %v132, %v132
    %v135 = vld [vmem:[%s4] sm:$0xf]
    %v136 = vld [vmem:[%s4 + $0x4] sm:$0xf]
    %v137 = vld [vmem:[%s4 + $0x8] sm:$0xf]
    %v138 = vld [vmem:[%s4 + $0xc] sm:$0xf]
    %v139 = vld [vmem:[%s4 + $0x10] sm:$0xf]
    %v140 = vld [vmem:[%s4 + $0x14] sm:$0xf]
    %v141 = vld [vmem:[%s4 + $0x18] sm:$0xf]
    %v142 = vld [vmem:[%s4 + $0x1c] sm:$0xf]
    %v143 = vld [vmem:[%s4 + $0x20] sm:$0xf]
    %v144 = vld [vmem:[%s4 + $0x24] sm:$0xf]
    %v145 = vld [vmem:[%s4 + $0x28] sm:$0xf]
    %v146 = vld [vmem:[%s4 + $0x2c] sm:$0xf]
    %v147 = vld [vmem:[%s4 + $0x30] sm:$0xf]
    %v148 = vld [vmem:[%s4 + $0x34] sm:$0xf]
    %v149 = vld [vmem:[%s4 + $0x38] sm:$0xf]
    %v150 = vld [vmem:[%s4 + $0x3c] sm:$0xf]
    %v167 = vunpack.c.l.b16 %v135
    %v168 = vunpack.c.l.b16 %v136
    %v169 = vunpack.c.l.b16 %v137
    %v170 = vunpack.c.l.b16 %v138
    %v171 = vunpack.c.l.b16 %v139
    %v172 = vunpack.c.l.b16 %v140
    %v173 = vunpack.c.l.b16 %v141
    %v174 = vunpack.c.l.b16 %v142
    %v175 = vunpack.c.l.b16 %v143
    %v176 = vunpack.c.l.b16 %v144
    %v177 = vunpack.c.l.b16 %v145
    %v178 = vunpack.c.l.b16 %v146
    %v179 = vunpack.c.l.b16 %v147
    %v180 = vunpack.c.l.b16 %v148
    %v181 = vunpack.c.l.b16 %v149
    %v182 = vunpack.c.l.b16 %v150
    %v183 = vpack.c.b16 %v168, %v167
    %v184 = vpack.c.b16 %v170, %v169
    %v185 = vpack.c.b16 %v172, %v171
    %v186 = vpack.c.b16 %v174, %v173
    %v187 = vpack.c.b16 %v176, %v175
    %v188 = vpack.c.b16 %v178, %v177
    %v189 = vpack.c.b16 %v180, %v179
    %v190 = vpack.c.b16 %v182, %v181
    %199 = vmatprep.subr.bf16.mxu0 0
    %200 = vmatpush1.bf16.msra.mxu0 %v190
    %201 = vmatprep.subr.bf16.mxu0 0
    %202 = vmatpush1.bf16.msra.mxu0 %v189
    %203 = vmatprep.subr.bf16.mxu0 0
    %204 = vmatpush1.bf16.msra.mxu0 %v188
    %205 = vmatprep.subr.bf16.mxu0 0
    %206 = vmatpush1.bf16.msra.mxu0 %v187
    %207 = vmatprep.subr.bf16.mxu0 0
    %208 = vmatpush1.bf16.msra.mxu0 %v186
    %209 = vmatprep.subr.bf16.mxu0 0
    %210 = vmatpush1.bf16.msra.mxu0 %v185
    %211 = vmatprep.subr.bf16.mxu0 0
    %212 = vmatpush1.bf16.msra.mxu0 %v184
    %213 = vmatprep.subr.bf16.mxu0 0
    %214 = vmatpush1.bf16.msra.mxu0 %v183
    %215 = vmatprep.subr.bf16.mxu0 0
    %216 = vmatpush2.bf16.msra.mxu0 0
    %217 = vmatprep.subr.bf16.mxu0 0
    %218 = vmatpush2.bf16.msra.mxu0 0
    %219 = vmatprep.subr.bf16.mxu0 0
    %220 = vmatpush2.bf16.msra.mxu0 0
    %221 = vmatprep.subr.bf16.mxu0 0
    %222 = vmatpush2.bf16.msra.mxu0 0
    %223 = vmatprep.subr.bf16.mxu0 0
    %224 = vmatpush2.bf16.msra.mxu0 0
    %225 = vmatprep.subr.bf16.mxu0 0
    %226 = vmatpush2.bf16.msra.mxu0 0
    %227 = vmatprep.subr.bf16.mxu0 0
    %228 = vmatpush2.bf16.msra.mxu0 0
    %229 = vmatprep.subr.bf16.mxu0 0
    %230 = vmatpush2.bf16.msra.mxu0 0
    %231 = vmatprep.mubr.bf16.mxu0 0
    %232 = vmatmul.mubr.bf16.gmra.mxu0 %v134
    %v233 = vpop.f32.mrf.mxu0
    %v234 = vadd.f32 %v133, %v233
    %v235 = vpop.f32.mrf.mxu0
    %v236 = vpop.f32.mrf.mxu0
    %v237 = vpop.f32.mrf.mxu0
    %238 = vdwg.mxu0
    %v239 = vmax.f32 %v234, 0.0
    %v240 = vld [vmem:[%s7 + $0x6] ss:$0 sm:$0xff]
    %v241 = vld [vmem:[%s7 + $0x7] ss:$0 sm:$0xff]
    %242 = vadd.xlane.f32.xlu0 %v239
    %v243 = vpop.xlane.xlu0 %242
    %v244 = vmul.f32 %v239, %v239
    %245 = vadd.xlane.f32.xlu0 %v244
    %v246 = vpop.xlane.xlu0 %245
    %v247 = vmul.f32 %v243, 0.03125
    %v248 = vmul.f32 %v246, 0.03125
    %v249 = vmul.f32 %v247, %v247
    %v250 = vsub.f32 %v248, %v249
    %v251 = vsub.f32 %v239, %v247
    %v252 = vadd.f32 %v250, 1e-05
    %v253 = vrsqrt.pop %v252
    %v254 = vmul.f32 %v251, %v253
    %v255 = vmul.f32 %v254, %v240
    %v256 = vadd.f32 %v255, %v241
    %v257 = vld [vmem:[%s1] sm:$0xff]
    %v258 = vld [vmem:[%s2] sm:$0xff]
    %260 = vset.pattern.permute.xlu0 0
    %261 = vperm.xlu0 %260, %v258
    %v262 = vpop.permute.xlu0 %261
    %v264 = vmul.f32 %v257, %v262
    %s265 = scalar_lea.vmem %s7, 32
    %v266 = vld [vmem:[%s265] ss:$8 sm:$0xf]
    %v267 = vpack.c.bf16 %v256, %v256
    %v268 = vpack.c.bf16 %v264, %v264
    %v269 = vld [vmem:[%s5] sm:$0xff]
    %v270 = vld [vmem:[%s5 + $0x8] sm:$0xff]
    %v271 = vld [vmem:[%s5 + $0x10] sm:$0xff]
    %v272 = vld [vmem:[%s5 + $0x18] sm:$0xff]
    %v273 = vld [vmem:[%s5 + $0x20] sm:$0xff]
    %v274 = vld [vmem:[%s5 + $0x28] sm:$0xff]
    %v275 = vld [vmem:[%s5 + $0x30] sm:$0xff]
    %v276 = vld [vmem:[%s5 + $0x38] sm:$0xff]
    %v277 = vld [vmem:[%s5 + $0x40] sm:$0xff]
    %v278 = vld [vmem:[%s5 + $0x48] sm:$0xff]
    %v279 = vld [vmem:[%s5 + $0x50] sm:$0xff]
    %v280 = vld [vmem:[%s5 + $0x58] sm:$0xff]
    %v281 = vld [vmem:[%s5 + $0x60] sm:$0xff]
    %v282 = vld [vmem:[%s5 + $0x68] sm:$0xff]
    %v283 = vld [vmem:[%s5 + $0x70] sm:$0xff]
    %v284 = vld [vmem:[%s5 + $0x78] sm:$0xff]
    %v285 = vld [vmem:[%s5 + $0x80] sm:$0xff]
    %v286 = vld [vmem:[%s5 + $0x88] sm:$0xff]
    %v287 = vld [vmem:[%s5 + $0x90] sm:$0xff]
    %v288 = vld [vmem:[%s5 + $0x98] sm:$0xff]
    %v289 = vld [vmem:[%s5 + $0xa0] sm:$0xff]
    %v290 = vld [vmem:[%s5 + $0xa8] sm:$0xff]
    %v291 = vld [vmem:[%s5 + $0xb0] sm:$0xff]
    %v292 = vld [vmem:[%s5 + $0xb8] sm:$0xff]
    %v293 = vld [vmem:[%s5 + $0xc0] sm:$0xff]
    %v294 = vld [vmem:[%s5 + $0xc8] sm:$0xff]
    %v295 = vld [vmem:[%s5 + $0xd0] sm:$0xff]
    %v296 = vld [vmem:[%s5 + $0xd8] sm:$0xff]
    %v297 = vld [vmem:[%s5 + $0xe0] sm:$0xff]
    %v298 = vld [vmem:[%s5 + $0xe8] sm:$0xff]
    %v299 = vld [vmem:[%s5 + $0xf0] sm:$0xff]
    %v300 = vld [vmem:[%s5 + $0xf8] sm:$0xff]
    %v301 = vld [vmem:[%s5 + $0x100] sm:$0xff]
    %v302 = vld [vmem:[%s5 + $0x108] sm:$0xff]
    %v303 = vld [vmem:[%s5 + $0x110] sm:$0xff]
    %v304 = vld [vmem:[%s5 + $0x118] sm:$0xff]
    %v305 = vld [vmem:[%s5 + $0x120] sm:$0xff]
    %v306 = vld [vmem:[%s5 + $0x128] sm:$0xff]
    %v307 = vld [vmem:[%s5 + $0x130] sm:$0xff]
    %v308 = vld [vmem:[%s5 + $0x138] sm:$0xff]
    %v309 = vld [vmem:[%s5 + $0x140] sm:$0xff]
    %v310 = vld [vmem:[%s5 + $0x148] sm:$0xff]
    %v311 = vld [vmem:[%s5 + $0x150] sm:$0xff]
    %v312 = vld [vmem:[%s5 + $0x158] sm:$0xff]
    %v313 = vld [vmem:[%s5 + $0x160] sm:$0xff]
    %v314 = vld [vmem:[%s5 + $0x168] sm:$0xff]
    %v315 = vld [vmem:[%s5 + $0x170] sm:$0xff]
    %v316 = vld [vmem:[%s5 + $0x178] sm:$0xff]
    %v317 = vld [vmem:[%s5 + $0x180] sm:$0xff]
    %v318 = vld [vmem:[%s5 + $0x188] sm:$0xff]
    %v319 = vld [vmem:[%s5 + $0x190] sm:$0xff]
    %v320 = vld [vmem:[%s5 + $0x198] sm:$0xff]
    %v321 = vld [vmem:[%s5 + $0x1a0] sm:$0xff]
    %v322 = vld [vmem:[%s5 + $0x1a8] sm:$0xff]
    %v323 = vld [vmem:[%s5 + $0x1b0] sm:$0xff]
    %v324 = vld [vmem:[%s5 + $0x1b8] sm:$0xff]
    %v325 = vld [vmem:[%s5 + $0x1c0] sm:$0xff]
    %v326 = vld [vmem:[%s5 + $0x1c8] sm:$0xff]
    %v327 = vld [vmem:[%s5 + $0x1d0] sm:$0xff]
    %v328 = vld [vmem:[%s5 + $0x1d8] sm:$0xff]
    %v329 = vld [vmem:[%s5 + $0x1e0] sm:$0xff]
    %v330 = vld [vmem:[%s5 + $0x1e8] sm:$0xff]
    %v331 = vld [vmem:[%s5 + $0x1f0] sm:$0xff]
    %v332 = vld [vmem:[%s5 + $0x1f8] sm:$0xff]
    %v334 = vlaneseq
    %v335 = vshrl.u32 %v334, 7
    %v336 = vsub.s32 0, %v335
    %v337 = vrot.slane %v266, %v336
    %v338 = vlaneseq
    %v339 = vshrl.u32 %v338, 7
    %v340 = vsub.s32 1, %v339
    %v341 = vrot.slane %v266, %v340
    %v342 = vlaneseq
    %v343 = vshrl.u32 %v342, 7
    %v344 = vsub.s32 2, %v343
    %v345 = vrot.slane %v266, %v344
    %v346 = vlaneseq
    %v347 = vshrl.u32 %v346, 7
    %v348 = vsub.s32 3, %v347
    %v349 = vrot.slane %v266, %v348
    %v418 = vunpack.c.l.b16 %v269
    %v419 = vunpack.c.h.b16 %v269
    %v420 = vunpack.c.l.b16 %v270
    %v421 = vunpack.c.h.b16 %v270
    %v422 = vunpack.c.l.b16 %v271
    %v423 = vunpack.c.h.b16 %v271
    %v424 = vunpack.c.l.b16 %v272
    %v425 = vunpack.c.h.b16 %v272
    %v426 = vunpack.c.l.b16 %v273
    %v427 = vunpack.c.h.b16 %v273
    %v428 = vunpack.c.l.b16 %v274
    %v429 = vunpack.c.h.b16 %v274
    %v430 = vunpack.c.l.b16 %v275
    %v431 = vunpack.c.h.b16 %v275
    %v432 = vunpack.c.l.b16 %v276
    %v433 = vunpack.c.h.b16 %v276
    %v434 = vunpack.c.l.b16 %v277
    %v435 = vunpack.c.h.b16 %v277
    %v436 = vunpack.c.l.b16 %v278
    %v437 = vunpack.c.h.b16 %v278
    %v438 = vunpack.c.l.b16 %v279
    %v439 = vunpack.c.h.b16 %v279
    %v440 = vunpack.c.l.b16 %v280
    %v441 = vunpack.c.h.b16 %v280
    %v442 = vunpack.c.l.b16 %v281
    %v443 = vunpack.c.h.b16 %v281
    %v444 = vunpack.c.l.b16 %v282
    %v445 = vunpack.c.h.b16 %v282
    %v446 = vunpack.c.l.b16 %v283
    %v447 = vunpack.c.h.b16 %v283
    %v448 = vunpack.c.l.b16 %v284
    %v449 = vunpack.c.h.b16 %v284
    %v450 = vunpack.c.l.b16 %v285
    %v451 = vunpack.c.h.b16 %v285
    %v452 = vunpack.c.l.b16 %v286
    %v453 = vunpack.c.h.b16 %v286
    %v454 = vunpack.c.l.b16 %v287
    %v455 = vunpack.c.h.b16 %v287
    %v456 = vunpack.c.l.b16 %v288
    %v457 = vunpack.c.h.b16 %v288
    %v458 = vunpack.c.l.b16 %v289
    %v459 = vunpack.c.h.b16 %v289
    %v460 = vunpack.c.l.b16 %v290
    %v461 = vunpack.c.h.b16 %v290
    %v462 = vunpack.c.l.b16 %v291
    %v463 = vunpack.c.h.b16 %v291
    %v464 = vunpack.c.l.b16 %v292
    %v465 = vunpack.c.h.b16 %v292
    %v466 = vunpack.c.l.b16 %v293
    %v467 = vunpack.c.h.b16 %v293
    %v468 = vunpack.c.l.b16 %v294
    %v469 = vunpack.c.h.b16 %v294
    %v470 = vunpack.c.l.b16 %v295
    %v471 = vunpack.c.h.b16 %v295
    %v472 = vunpack.c.l.b16 %v296
    %v473 = vunpack.c.h.b16 %v296
    %v474 = vunpack.c.l.b16 %v297
    %v475 = vunpack.c.h.b16 %v297
    %v476 = vunpack.c.l.b16 %v298
    %v477 = vunpack.c.h.b16 %v298
    %v478 = vunpack.c.l.b16 %v299
    %v479 = vunpack.c.h.b16 %v299
    %v480 = vunpack.c.l.b16 %v300
    %v481 = vunpack.c.h.b16 %v300
    %v482 = vunpack.c.l.b16 %v301
    %v483 = vunpack.c.h.b16 %v301
    %v484 = vunpack.c.l.b16 %v302
    %v485 = vunpack.c.h.b16 %v302
    %v486 = vunpack.c.l.b16 %v303
    %v487 = vunpack.c.h.b16 %v303
    %v488 = vunpack.c.l.b16 %v304
    %v489 = vunpack.c.h.b16 %v304
    %v490 = vunpack.c.l.b16 %v305
    %v491 = vunpack.c.h.b16 %v305
    %v492 = vunpack.c.l.b16 %v306
    %v493 = vunpack.c.h.b16 %v306
    %v494 = vunpack.c.l.b16 %v307
    %v495 = vunpack.c.h.b16 %v307
    %v496 = vunpack.c.l.b16 %v308
    %v497 = vunpack.c.h.b16 %v308
    %v498 = vunpack.c.l.b16 %v309
    %v499 = vunpack.c.h.b16 %v309
    %v500 = vunpack.c.l.b16 %v310
    %v501 = vunpack.c.h.b16 %v310
    %v502 = vunpack.c.l.b16 %v311
    %v503 = vunpack.c.h.b16 %v311
    %v504 = vunpack.c.l.b16 %v312
    %v505 = vunpack.c.h.b16 %v312
    %v506 = vunpack.c.l.b16 %v313
    %v507 = vunpack.c.h.b16 %v313
    %v508 = vunpack.c.l.b16 %v314
    %v509 = vunpack.c.h.b16 %v314
    %v510 = vunpack.c.l.b16 %v315
    %v511 = vunpack.c.h.b16 %v315
    %v512 = vunpack.c.l.b16 %v316
    %v513 = vunpack.c.h.b16 %v316
    %v514 = vunpack.c.l.b16 %v317
    %v515 = vunpack.c.h.b16 %v317
    %v516 = vunpack.c.l.b16 %v318
    %v517 = vunpack.c.h.b16 %v318
    %v518 = vunpack.c.l.b16 %v319
    %v519 = vunpack.c.h.b16 %v319
    %v520 = vunpack.c.l.b16 %v320
    %v521 = vunpack.c.h.b16 %v320
    %v522 = vunpack.c.l.b16 %v321
    %v523 = vunpack.c.h.b16 %v321
    %v524 = vunpack.c.l.b16 %v322
    %v525 = vunpack.c.h.b16 %v322
    %v526 = vunpack.c.l.b16 %v323
    %v527 = vunpack.c.h.b16 %v323
    %v528 = vunpack.c.l.b16 %v324
    %v529 = vunpack.c.h.b16 %v324
    %v530 = vunpack.c.l.b16 %v325
    %v531 = vunpack.c.h.b16 %v325
    %v532 = vunpack.c.l.b16 %v326
    %v533 = vunpack.c.h.b16 %v326
    %v534 = vunpack.c.l.b16 %v327
    %v535 = vunpack.c.h.b16 %v327
    %v536 = vunpack.c.l.b16 %v328
    %v537 = vunpack.c.h.b16 %v328
    %v538 = vunpack.c.l.b16 %v329
    %v539 = vunpack.c.h.b16 %v329
    %v540 = vunpack.c.l.b16 %v330
    %v541 = vunpack.c.h.b16 %v330
    %v542 = vunpack.c.l.b16 %v331
    %v543 = vunpack.c.h.b16 %v331
    %v544 = vunpack.c.l.b16 %v332
    %v545 = vunpack.c.h.b16 %v332
    %v546 = vpack.c.b16 %v422, %v418
    %v547 = vpack.c.b16 %v423, %v419
    %v548 = vpack.c.b16 %v424, %v420
    %v549 = vpack.c.b16 %v425, %v421
    %v550 = vpack.c.b16 %v430, %v426
    %v551 = vpack.c.b16 %v431, %v427
    %v552 = vpack.c.b16 %v432, %v428
    %v553 = vpack.c.b16 %v433, %v429
    %v554 = vpack.c.b16 %v438, %v434
    %v555 = vpack.c.b16 %v439, %v435
    %v556 = vpack.c.b16 %v440, %v436
    %v557 = vpack.c.b16 %v441, %v437
    %v558 = vpack.c.b16 %v446, %v442
    %v559 = vpack.c.b16 %v447, %v443
    %v560 = vpack.c.b16 %v448, %v444
    %v561 = vpack.c.b16 %v449, %v445
    %v562 = vpack.c.b16 %v454, %v450
    %v563 = vpack.c.b16 %v455, %v451
    %v564 = vpack.c.b16 %v456, %v452
    %v565 = vpack.c.b16 %v457, %v453
    %v566 = vpack.c.b16 %v462, %v458
    %v567 = vpack.c.b16 %v463, %v459
    %v568 = vpack.c.b16 %v464, %v460
    %v569 = vpack.c.b16 %v465, %v461
    %v570 = vpack.c.b16 %v470, %v466
    %v571 = vpack.c.b16 %v471, %v467
    %v572 = vpack.c.b16 %v472, %v468
    %v573 = vpack.c.b16 %v473, %v469
    %v574 = vpack.c.b16 %v478, %v474
    %v575 = vpack.c.b16 %v479, %v475
    %v576 = vpack.c.b16 %v480, %v476
    %v577 = vpack.c.b16 %v481, %v477
    %v578 = vpack.c.b16 %v486, %v482
    %v579 = vpack.c.b16 %v487, %v483
    %v580 = vpack.c.b16 %v488, %v484
    %v581 = vpack.c.b16 %v489, %v485
    %v582 = vpack.c.b16 %v494, %v490
    %v583 = vpack.c.b16 %v495, %v491
    %v584 = vpack.c.b16 %v496, %v492
    %v585 = vpack.c.b16 %v497, %v493
    %v586 = vpack.c.b16 %v502, %v498
    %v587 = vpack.c.b16 %v503, %v499
    %v588 = vpack.c.b16 %v504, %v500
    %v589 = vpack.c.b16 %v505, %v501
    %v590 = vpack.c.b16 %v510, %v506
    %v591 = vpack.c.b16 %v511, %v507
    %v592 = vpack.c.b16 %v512, %v508
    %v593 = vpack.c.b16 %v513, %v509
    %v594 = vpack.c.b16 %v518, %v514
    %v595 = vpack.c.b16 %v519, %v515
    %v596 = vpack.c.b16 %v520, %v516
    %v597 = vpack.c.b16 %v521, %v517
    %v598 = vpack.c.b16 %v526, %v522
    %v599 = vpack.c.b16 %v527, %v523
    %v600 = vpack.c.b16 %v528, %v524
    %v601 = vpack.c.b16 %v529, %v525
    %v602 = vpack.c.b16 %v534, %v530
    %v603 = vpack.c.b16 %v535, %v531
    %v604 = vpack.c.b16 %v536, %v532
    %v605 = vpack.c.b16 %v537, %v533
    %v606 = vpack.c.b16 %v542, %v538
    %v607 = vpack.c.b16 %v543, %v539
    %v608 = vpack.c.b16 %v544, %v540
    %v609 = vpack.c.b16 %v545, %v541
    %674 = vmatprep.subr.bf16.mxu0 %v575
    %675 = vmatpush1.bf16.msra.mxu0 %v574
    %676 = vmatprep.subr.bf16.mxu0 %v571
    %677 = vmatpush1.bf16.msra.mxu0 %v570
    %678 = vmatprep.subr.bf16.mxu0 %v567
    %679 = vmatpush1.bf16.msra.mxu0 %v566
    %680 = vmatprep.subr.bf16.mxu0 %v563
    %681 = vmatpush1.bf16.msra.mxu0 %v562
    %682 = vmatprep.subr.bf16.mxu0 %v559
    %683 = vmatpush1.bf16.msra.mxu0 %v558
    %684 = vmatprep.subr.bf16.mxu0 %v555
    %685 = vmatpush1.bf16.msra.mxu0 %v554
    %686 = vmatprep.subr.bf16.mxu0 %v551
    %687 = vmatpush1.bf16.msra.mxu0 %v550
    %688 = vmatprep.subr.bf16.mxu0 %v547
    %689 = vmatpush1.bf16.msra.mxu0 %v546
    %690 = vmatprep.subr.bf16.mxu0 %v607
    %691 = vmatpush2.bf16.msra.mxu0 %v606
    %692 = vmatprep.subr.bf16.mxu0 %v603
    %693 = vmatpush2.bf16.msra.mxu0 %v602
    %694 = vmatprep.subr.bf16.mxu0 %v599
    %695 = vmatpush2.bf16.msra.mxu0 %v598
    %696 = vmatprep.subr.bf16.mxu0 %v595
    %697 = vmatpush2.bf16.msra.mxu0 %v594
    %698 = vmatprep.subr.bf16.mxu0 %v591
    %699 = vmatpush2.bf16.msra.mxu0 %v590
    %700 = vmatprep.subr.bf16.mxu0 %v587
    %701 = vmatpush2.bf16.msra.mxu0 %v586
    %702 = vmatprep.subr.bf16.mxu0 %v583
    %703 = vmatpush2.bf16.msra.mxu0 %v582
    %704 = vmatprep.subr.bf16.mxu0 %v579
    %705 = vmatpush2.bf16.msra.mxu0 %v578
    %706 = vmatprep.mubr.bf16.mxu0 %v268
    %707 = vmatmul.mubr.bf16.gmra.mxu0 %v267
    %v708 = vpop.f32.mrf.mxu0
    %v709 = vadd.f32 %v337, %v708
    %v710 = vpop.f32.mrf.mxu0
    %v711 = vadd.f32 %v341, %v710
    %v712 = vpop.f32.mrf.mxu0
    %v713 = vpop.f32.mrf.mxu0
    %714 = vdwg.mxu0
    %715 = vmatprep.subr.bf16.mxu0 %v577
    %716 = vmatpush1.bf16.msra.mxu0 %v576
    %717 = vmatprep.subr.bf16.mxu0 %v573
    %718 = vmatpush1.bf16.msra.mxu0 %v572
    %719 = vmatprep.subr.bf16.mxu0 %v569
    %720 = vmatpush1.bf16.msra.mxu0 %v568
    %721 = vmatprep.subr.bf16.mxu0 %v565
    %722 = vmatpush1.bf16.msra.mxu0 %v564
    %723 = vmatprep.subr.bf16.mxu0 %v561
    %724 = vmatpush1.bf16.msra.mxu0 %v560
    %725 = vmatprep.subr.bf16.mxu0 %v557
    %726 = vmatpush1.bf16.msra.mxu0 %v556
    %727 = vmatprep.subr.bf16.mxu0 %v553
    %728 = vmatpush1.bf16.msra.mxu0 %v552
    %729 = vmatprep.subr.bf16.mxu0 %v549
    %730 = vmatpush1.bf16.msra.mxu0 %v548
    %731 = vmatprep.subr.bf16.mxu0 %v609
    %732 = vmatpush2.bf16.msra.mxu0 %v608
    %733 = vmatprep.subr.bf16.mxu0 %v605
    %734 = vmatpush2.bf16.msra.mxu0 %v604
    %735 = vmatprep.subr.bf16.mxu0 %v601
    %736 = vmatpush2.bf16.msra.mxu0 %v600
    %737 = vmatprep.subr.bf16.mxu0 %v597
    %738 = vmatpush2.bf16.msra.mxu0 %v596
    %739 = vmatprep.subr.bf16.mxu0 %v593
    %740 = vmatpush2.bf16.msra.mxu0 %v592
    %741 = vmatprep.subr.bf16.mxu0 %v589
    %742 = vmatpush2.bf16.msra.mxu0 %v588
    %743 = vmatprep.subr.bf16.mxu0 %v585
    %744 = vmatpush2.bf16.msra.mxu0 %v584
    %745 = vmatprep.subr.bf16.mxu0 %v581
    %746 = vmatpush2.bf16.msra.mxu0 %v580
    %747 = vmatprep.mubr.bf16.mxu0 %v268
    %748 = vmatmul.mubr.bf16.gmra.mxu0 %v267
    %v749 = vpop.f32.mrf.mxu0
    %v750 = vadd.f32 %v345, %v749
    %v751 = vpop.f32.mrf.mxu0
    %v752 = vadd.f32 %v349, %v751
    %v753 = vpop.f32.mrf.mxu0
    %v754 = vpop.f32.mrf.mxu0
    %755 = vdwg.mxu0
    %v756 = vxor.u32 %v709, 2147483648
    %v757 = vmul.f32 %v756, 1.442695
    %v758 = vpow.pop %v757
    %v759 = vadd.f32 %v758, 1.0
    %v760 = vrcp.pop %v759
    %v761 = vmul.f32 1.0, %v760
    %v762 = vxor.u32 %v711, 2147483648
    %v763 = vmul.f32 %v762, 1.442695
    %v764 = vpow.pop %v763
    %v765 = vadd.f32 %v764, 1.0
    %v766 = vrcp.pop %v765
    %v767 = vmul.f32 1.0, %v766
    %v768 = vmul.f32 %v761, %v752
    %v769 = vadd.f32 %v750, %v768
    %v770 = vtanh.pop %v769
    %v771 = vsub.f32 1.0, %v767
    %v772 = vmul.f32 %v771, %v770
    %v773 = vmul.f32 %v767, %v264
    %v774 = vadd.f32 %v772, %v773
    %775 = vst [vmem:[%s9] sm:$0xff] %v774
    %v776 = vld [vmem:[%s7 + $0x21] ss:$0 sm:$0xff]
    %v777 = vld [vmem:[%s7 + $0x22] ss:$0 sm:$0xff]
    %778 = vadd.xlane.f32.xlu0 %v774
    %v779 = vpop.xlane.xlu0 %778
    %v780 = vmul.f32 %v774, %v774
    %781 = vadd.xlane.f32.xlu0 %v780
    %v782 = vpop.xlane.xlu0 %781
    %v783 = vmul.f32 %v779, 0.03125
    %v784 = vmul.f32 %v782, 0.03125
    %v785 = vmul.f32 %v783, %v783
    %v786 = vsub.f32 %v784, %v785
    %v787 = vsub.f32 %v774, %v783
    %v788 = vadd.f32 %v786, 1e-05
    %v789 = vrsqrt.pop %v788
    %v790 = vmul.f32 %v787, %v789
    %v791 = vmul.f32 %v790, %v776
    %v792 = vadd.f32 %v791, %v777
    %v793 = vld [vmem:[%s7 + $0x23] ss:$0 sm:$0xff]
    %v794 = vpack.c.bf16 %v792, %v792
    %v795 = vld [vmem:[%s6] sm:$0xf]
    %v796 = vld [vmem:[%s6 + $0x4] sm:$0xf]
    %v797 = vld [vmem:[%s6 + $0x8] sm:$0xf]
    %v798 = vld [vmem:[%s6 + $0xc] sm:$0xf]
    %v799 = vld [vmem:[%s6 + $0x10] sm:$0xf]
    %v800 = vld [vmem:[%s6 + $0x14] sm:$0xf]
    %v801 = vld [vmem:[%s6 + $0x18] sm:$0xf]
    %v802 = vld [vmem:[%s6 + $0x1c] sm:$0xf]
    %v803 = vld [vmem:[%s6 + $0x20] sm:$0xf]
    %v804 = vld [vmem:[%s6 + $0x24] sm:$0xf]
    %v805 = vld [vmem:[%s6 + $0x28] sm:$0xf]
    %v806 = vld [vmem:[%s6 + $0x2c] sm:$0xf]
    %v807 = vld [vmem:[%s6 + $0x30] sm:$0xf]
    %v808 = vld [vmem:[%s6 + $0x34] sm:$0xf]
    %v809 = vld [vmem:[%s6 + $0x38] sm:$0xf]
    %v810 = vld [vmem:[%s6 + $0x3c] sm:$0xf]
    %v827 = vunpack.c.l.b16 %v795
    %v828 = vunpack.c.l.b16 %v796
    %v829 = vunpack.c.l.b16 %v797
    %v830 = vunpack.c.l.b16 %v798
    %v831 = vunpack.c.l.b16 %v799
    %v832 = vunpack.c.l.b16 %v800
    %v833 = vunpack.c.l.b16 %v801
    %v834 = vunpack.c.l.b16 %v802
    %v835 = vunpack.c.l.b16 %v803
    %v836 = vunpack.c.l.b16 %v804
    %v837 = vunpack.c.l.b16 %v805
    %v838 = vunpack.c.l.b16 %v806
    %v839 = vunpack.c.l.b16 %v807
    %v840 = vunpack.c.l.b16 %v808
    %v841 = vunpack.c.l.b16 %v809
    %v842 = vunpack.c.l.b16 %v810
    %v843 = vpack.c.b16 %v828, %v827
    %v844 = vpack.c.b16 %v830, %v829
    %v845 = vpack.c.b16 %v832, %v831
    %v846 = vpack.c.b16 %v834, %v833
    %v847 = vpack.c.b16 %v836, %v835
    %v848 = vpack.c.b16 %v838, %v837
    %v849 = vpack.c.b16 %v840, %v839
    %v850 = vpack.c.b16 %v842, %v841
    %859 = vmatprep.subr.bf16.mxu0 0
    %860 = vmatpush1.bf16.msra.mxu0 %v850
    %861 = vmatprep.subr.bf16.mxu0 0
    %862 = vmatpush1.bf16.msra.mxu0 %v849
    %863 = vmatprep.subr.bf16.mxu0 0
    %864 = vmatpush1.bf16.msra.mxu0 %v848
    %865 = vmatprep.subr.bf16.mxu0 0
    %866 = vmatpush1.bf16.msra.mxu0 %v847
    %867 = vmatprep.subr.bf16.mxu0 0
    %868 = vmatpush1.bf16.msra.mxu0 %v846
    %869 = vmatprep.subr.bf16.mxu0 0
    %870 = vmatpush1.bf16.msra.mxu0 %v845
    %871 = vmatprep.subr.bf16.mxu0 0
    %872 = vmatpush1.bf16.msra.mxu0 %v844
    %873 = vmatprep.subr.bf16.mxu0 0
    %874 = vmatpush1.bf16.msra.mxu0 %v843
    %875 = vmatprep.subr.bf16.mxu0 0
    %876 = vmatpush2.bf16.msra.mxu0 0
    %877 = vmatprep.subr.bf16.mxu0 0
    %878 = vmatpush2.bf16.msra.mxu0 0
    %879 = vmatprep.subr.bf16.mxu0 0
    %880 = vmatpush2.bf16.msra.mxu0 0
    %881 = vmatprep.subr.bf16.mxu0 0
    %882 = vmatpush2.bf16.msra.mxu0 0
    %883 = vmatprep.subr.bf16.mxu0 0
    %884 = vmatpush2.bf16.msra.mxu0 0
    %885 = vmatprep.subr.bf16.mxu0 0
    %886 = vmatpush2.bf16.msra.mxu0 0
    %887 = vmatprep.subr.bf16.mxu0 0
    %888 = vmatpush2.bf16.msra.mxu0 0
    %889 = vmatprep.subr.bf16.mxu0 0
    %890 = vmatpush2.bf16.msra.mxu0 0
    %891 = vmatprep.mubr.bf16.mxu0 0
    %892 = vmatmul.mubr.bf16.gmra.mxu0 %v794
    %v893 = vpop.f32.mrf.mxu0
    %v894 = vadd.f32 %v793, %v893
    %v895 = vpop.f32.mrf.mxu0
    %v896 = vpop.f32.mrf.mxu0
    %v897 = vpop.f32.mrf.mxu0
    %898 = vdwg.mxu0
    %899 = vst [vmem:[#allocation2] sm:$0xff] %v894
    // Predicated region
    $region34: #{rnn_agent_happo_forward.1} parent=1 // pred_check
      _
    $region35: #{rnn_agent_happo_forward.1} parent=1 // pred_check_branch
      %901 = sbr.rel (0) target = $region37
    $region36: #{rnn_agent_happo_forward.1} parent=1 // pred_region
      %s903 = ssub.s32 128, 128
      %904 = vsyncadd [#allocation3], %s903
      %s906 = sshll.u32 [#allocation2], 4
      %s907 = int_to_ptr.vmem [resolvable:$true] %s906
      %909 = dma.vmem_to_hbm [thread:$0]  %s907, 128, %s8, [#allocation3]
    $region37: #{rnn_agent_happo_forward.1} parent=1 // pred_fallthru
      _
    // Predicated region
    $region38: #{rnn_agent_happo_forward.1} parent=1 // pred_check
      _
    $region39: #{rnn_agent_happo_forward.1} parent=1 // pred_check_branch
      %911 = sbr.rel (0) target = $region41
    $region40: #{rnn_agent_happo_forward.1} parent=1 // pred_region
      _
    $region41: #{rnn_agent_happo_forward.1} parent=1 // pred_fallthru
      _
    // Predicated region
    $region42: #{rnn_agent_happo_forward.1} parent=1 // pred_check
      _
    $region43: #{rnn_agent_happo_forward.1} parent=1 // pred_check_branch
      %913 = sbr.rel (0) target = $region45
    $region44: #{rnn_agent_happo_forward.1} parent=1 // pred_region
      %914 = dma.done [#allocation3], 128
    $region45: #{rnn_agent_happo_forward.1} parent=1 // pred_fallthru
      _
    // Predicated region
    $region46: #{rnn_agent_happo_forward.1} parent=1 // pred_check
      _
    $region47: #{rnn_agent_happo_forward.1} parent=1 // pred_check_branch
      %916 = sbr.rel (0) target = $region49
    $region48: #{rnn_agent_happo_forward.1} parent=1 // pred_region
      _
    $region49: #{rnn_agent_happo_forward.1} parent=1 // pred_fallthru
      _
    %917 = vsyncpa [#allocation3], 1

</llo_original>
